<compile_context>
chip_gen: v5e
topology: v5e:2x2
jax: 0.10.0
libtpu: 0.0.40
codegen_flags: <defaults>
</compile_context>

<pallas_src>
import functools

import numpy as np
import jax
import jax.numpy as jnp
from jax.experimental import pallas as pl
from jax.experimental.pallas import tpu as pltpu


def _vardropout_kernel(bits_ref, x_ref, o_ref, *, threshold, inv_keep):
    """bits_ref: (bB, 1, F) uint16/uint32 bits; x_ref/o_ref: (bB, tT, F)."""
    bits = bits_ref[...]
    if bits.dtype == jnp.uint16:
        # Small-T path: zero-extend the tiny (bB, 1, F) bits block to int32 for a
        # safe signed compare (values fit in 16 bits, threshold <= 65535).
        keep = bits.astype(jnp.int32) < jnp.int32(threshold)
    else:
        keep = bits < jnp.uint32(threshold)
    # Fold the 1/keep scale into the (bB, 1, F) mask -> one multiply per element
    # of the big tile, no f32 upcast of the full tile, no scratch materialization.
    mask_scaled = jnp.where(keep, jnp.float32(inv_keep),
                            jnp.float32(0.0)).astype(o_ref.dtype)
    o_ref[...] = x_ref[...] * mask_scaled        # broadcasts over the seq dim


@functools.lru_cache(maxsize=1)
def _tpu_tuning():
    """Generation-aware (gen, target per-array block bytes, scoped-VMEM limit)."""
    gen = "unknown"
    try:
        kind = jax.devices()[0].device_kind.lower()
        if "v5 lite" in kind or "v5e" in kind or "v5lite" in kind:
            gen = "v5e"
        elif "v6" in kind:
            gen = "v6e"
        elif "v7" in kind or "7x" in kind:
            gen = "v7x"
    except Exception:
        pass
    if gen == "v7x":
        # 64 MiB physical VMEM, ~3.2 TB/s HBM: bigger blocks shrink the fixed
        # ~0.35 us/step overhead fraction; 48 MiB limit leaves headroom.
        return gen, 8 << 20, 48 << 20
    if gen == "v6e":
        # ~4 MiB blocks sit on the measured ~86% HBM-roofline plateau; raise the
        # scoped limit so the working set is not pressed against the 32 MiB default.
        return gen, 4 << 20, 64 << 20
    if gen == "v5e":
        # Default scoped VMEM is only 16 MiB; explicitly raise it (128 MiB
        # physical) so the 4 MiB-per-array double-buffered working set fits.
        return gen, 4 << 20, 64 << 20
    # Unknown generation (v4/v5p/interpret/...): conservative.
    return gen, 2 << 20, 32 << 20


def _plan_tiles(B, T, F, x_itemsize, bits_itemsize,
                target_block_bytes, vmem_budget_bytes, min_grid_steps):
    """Pick (bB, tT, T_pad, F_pad) so every block is (8,128)-aligned (or full
    extent) and the whole double-buffered working set fits the VMEM budget."""
    row_align = 8 if x_itemsize >= 4 else max(8, 32 // x_itemsize)
    F_pad = F if F % 128 == 0 else ((F + 127) // 128) * 128   # lane-dense last dim

    def working_set(bb, tt):
        # double-buffered: 2 x (x in block + out block + bits block)
        return 2 * (2 * bb * tt * F_pad * x_itemsize + bb * F_pad * bits_itemsize)

    # Per-array cap derived from the real budget (2 in + 2 out buffers + bits).
    per_array_cap = min(target_block_bytes, vmem_budget_bytes // 5)

    slab_bytes = T * F_pad * x_itemsize
    if slab_bytes <= per_array_cap:
        tT, T_pad = T, T                      # full seq extent per block (always legal)
    else:
        rows = max(row_align,
                   (per_array_cap // (F_pad * x_itemsize)) // row_align * row_align)
        tT = 0
        if T % row_align == 0:
            cand = rows                       # prefer an exact divisor: no seq padding
            while cand >= row_align:
                if T % cand == 0:
                    tT = cand
                    break
                cand -= row_align
        if tT:
            T_pad = T
        else:                                 # hard fallback: pad T so tiles stay aligned
            tT = rows
            T_pad = pl.cdiv(T, tT) * tT

    # Batch packing: amortize the per-step pipeline overhead when per-batch slabs
    # are small; capped so v7x keeps enough grid steps for megacore sharding.
    bB = 1
    if tT == T_pad:
        while (bB * 2 <= B and B % (bB * 2) == 0
               and bB * 2 * T_pad * F_pad * x_itemsize <= per_array_cap
               and working_set(bB * 2, T_pad) <= vmem_budget_bytes
               and (B // (bB * 2)) >= min_grid_steps):
            bB *= 2
    return bB, tT, T_pad, F_pad


def var_dropout(x: jax.Array, dropout: float, key: jax.Array,
                training: bool = True) -> jax.Array:
    """Pallas VarDropout forward.

    Args:
      x:        (B, T, F) input.
      dropout:  dropout probability.
      key:      jax PRNG key used to draw the (B, 1, F) Bernoulli mask
                (explicit stand-in for torch.bernoulli's global RNG state).
      training: if False (or dropout == 0) the input is returned unchanged,
                matching `if not self.training or self.dropout == 0`.
    """
    if not training or dropout == 0.0:
        return x

    B, T, F = x.shape
    keep_prob = 1.0 - float(dropout)
    inv_keep = 1.0 / keep_prob

    gen, target_block_bytes, vmem_limit_bytes = _tpu_tuning()
    vmem_budget = (vmem_limit_bytes * 4) // 5          # headroom for internal scratch
    min_grid_steps = 8 if gen == "v7x" else 1          # keep both v7x TCs fed

    # Small T: uint16 bits cut mask HBM traffic (probability quantized to 1/65536).
    bits_dtype = jnp.uint16 if T <= 16 else jnp.uint32
    span = 1 << (8 * jnp.dtype(bits_dtype).itemsize)
    threshold = min(int(round(keep_prob * span)), span - 1)

    x_itemsize = jnp.dtype(x.dtype).itemsize
    bits_itemsize = jnp.dtype(bits_dtype).itemsize
    bB, tT, T_pad, F_pad = _plan_tiles(B, T, F, x_itemsize, bits_itemsize,
                                       target_block_bytes, vmem_budget,
                                       min_grid_steps)

    xp = x
    if T_pad != T or F_pad != F:
        xp = jnp.pad(x, ((0, 0), (0, T_pad - T), (0, F_pad - F)))

    # One (B, 1, F_pad) draw shared across the whole sequence dim.
    bits = jax.random.bits(key, (B, 1, F_pad), dtype=bits_dtype)

    kernel = functools.partial(_vardropout_kernel,
                               threshold=threshold, inv_keep=inv_keep)

    out = pl.pallas_call(
        kernel,
        out_shape=jax.ShapeDtypeStruct((B, T_pad, F_pad), x.dtype),
        # b outer, t inner: the bits block index only depends on b, so its DMA is
        # elided across consecutive T steps.
        grid=(B // bB, T_pad // tT),
        in_specs=[
            pl.BlockSpec((bB, 1, F_pad), lambda b, t: (b, 0, 0)),    # mask bits
            pl.BlockSpec((bB, tT, F_pad), lambda b, t: (b, t, 0)),   # input slab
        ],
        out_specs=pl.BlockSpec((bB, tT, F_pad), lambda b, t: (b, t, 0)),
        compiler_params=pltpu.CompilerParams(
            dimension_semantics=("parallel", "parallel"),            # megacore-shardable
            vmem_limit_bytes=vmem_limit_bytes,
        ),
    )(bits, xp)

    if T_pad != T or F_pad != F:
        out = out[:, :T, :F]
    return out


def _var_dropout_ref(x, dropout, key):
    """Pure-JAX reference reproducing the wrapper's bits draw + threshold."""
    B, T, F = x.shape
    keep_prob = 1.0 - float(dropout)
    F_pad = F if F % 128 == 0 else ((F + 127) // 128) * 128
    bits_dtype = jnp.uint16 if T <= 16 else jnp.uint32
    span = 1 << (8 * jnp.dtype(bits_dtype).itemsize)
    thr = min(int(round(keep_prob * span)), span - 1)
    bits = jax.random.bits(key, (B, 1, F_pad), dtype=bits_dtype)[:, :, :F]
    keep = bits.astype(jnp.uint32) < jnp.uint32(thr)
    mask = jnp.where(keep, jnp.float32(1.0 / keep_prob),
                     jnp.float32(0.0)).astype(x.dtype)
    return x * mask


if __name__ == "__main__":
    key = jax.random.PRNGKey(0)
    kx, kmask, kx2, kmask2, kx3, kmask3 = jax.random.split(key, 6)

    dropout = 0.3
    keep = 1.0 - dropout

    # ---- main case: small aligned shape, uint16 (small-T) bits path ----
    B, T, F = 2, 8, 128
    x = jax.random.normal(kx, (B, T, F), dtype=jnp.float32)
    out = jax.block_until_ready(var_dropout(x, dropout, kmask, training=True))
    assert out.shape == x.shape and out.dtype == x.dtype
    ref = _var_dropout_ref(x, dropout, kmask)
    assert bool(jnp.allclose(out, ref, rtol=1e-6, atol=1e-6))

    # Structural VarDropout contract: each (b, :, f) column is all 0 or all 1/keep.
    ratio = jnp.where(jnp.abs(x) > 1e-6, out / x, 0.0)
    col_min, col_max = jnp.min(ratio, axis=1), jnp.max(ratio, axis=1)
    assert bool(jnp.all(jnp.abs(col_max - col_min) < 1e-4))
    is_zero = jnp.abs(col_max) < 1e-4
    is_scaled = jnp.abs(col_max - 1.0 / keep) < 1e-3
    assert bool(jnp.all(is_zero | is_scaled))

    # ---- unaligned F: exercises the lane-dense padding path ----
    Bp, Tp, Fp = 2, 8, 96
    xp = jax.random.normal(kx2, (Bp, Tp, Fp), dtype=jnp.float32)
    outp = jax.block_until_ready(var_dropout(xp, dropout, kmask2, training=True))
    assert outp.shape == xp.shape
    refp = _var_dropout_ref(xp, dropout, kmask2)
    assert bool(jnp.allclose(outp, refp, rtol=1e-6, atol=1e-6))

    # ---- longer sequence: exercises the uint32 bits path ----
    Bl, Tl, Fl = 2, 32, 128
    xl = jax.random.normal(kx3, (Bl, Tl, Fl), dtype=jnp.float32)
    outl = jax.block_until_ready(var_dropout(xl, dropout, kmask3, training=True))
    refl = _var_dropout_ref(xl, dropout, kmask3)
    assert bool(jnp.allclose(outl, refl, rtol=1e-6, atol=1e-6))

    # ---- bf16 input path ----
    xb = x.astype(jnp.bfloat16)
    outb = jax.block_until_ready(var_dropout(xb, dropout, kmask, training=True))
    refb = _var_dropout_ref(xb, dropout, kmask)
    assert bool(jnp.allclose(outb.astype(jnp.float32), refb.astype(jnp.float32),
                             rtol=1e-2, atol=1e-2))

    # ---- eval mode / dropout == 0 -> identity ----
    assert bool(jnp.all(var_dropout(x, dropout, kmask, training=False) == x))
    assert bool(jnp.all(var_dropout(x, 0.0, kmask, training=True) == x))

    print("KERNEL_OK")
</pallas_src>

<mosaic_0001>
module attributes {stable_mosaic.version = 11 : i64} {
  func.func @_vardropout_kernel(%arg0: i32, %arg1: i32, %arg2: memref<2x1x128xi16, #tpu.memory_space<vmem>>, %arg3: memref<2x8x128xf32, #tpu.memory_space<vmem>>, %arg4: memref<2x8x128xf32, #tpu.memory_space<vmem>>) attributes {dimension_semantics = [#tpu.dimension_semantics<parallel>, #tpu.dimension_semantics<parallel>], iteration_bounds = array<i64: 1, 1>, scalar_prefetch = 0 : i64, scratch_operands = 0 : i64, tpu.core_type = #tpu.core_type<tc>, window_params = [{transform_indices = @transform_0, window_bounds = array<i64: 2, 1, 128>}, {transform_indices = @transform_1, window_bounds = array<i64: 2, 8, 128>}, {transform_indices = @transform_2, window_bounds = array<i64: 2, 8, 128>}]} {
    %c0 = arith.constant 0 : index
    %c0_0 = arith.constant 0 : index
    %c0_1 = arith.constant 0 : index
    %0 = vector.load %arg2[%c0, %c0_0, %c0_1] : memref<2x1x128xi16, #tpu.memory_space<vmem>>, vector<2x1x128xi16>
    %1 = arith.extui %0 : vector<2x1x128xi16> to vector<2x1x128xi32>
    %c45875_i32 = arith.constant 45875 : i32
    %2 = vector.broadcast %c45875_i32 : i32 to vector<2x1x128xi32>
    %3 = arith.cmpi slt, %1, %2 : vector<2x1x128xi32>
    %cst = arith.constant 1.42857146 : f32
    %cst_2 = arith.constant 0.000000e+00 : f32
    %4 = vector.broadcast %cst : f32 to vector<2x1x128xf32>
    %5 = vector.broadcast %cst_2 : f32 to vector<2x1x128xf32>
    %6 = arith.select %3, %4, %5 : vector<2x1x128xi1>, vector<2x1x128xf32>
    %c0_3 = arith.constant 0 : index
    %c0_4 = arith.constant 0 : index
    %c0_5 = arith.constant 0 : index
    %7 = vector.load %arg3[%c0_3, %c0_4, %c0_5] : memref<2x8x128xf32, #tpu.memory_space<vmem>>, vector<2x8x128xf32>
    %8 = vector.broadcast %6 : vector<2x1x128xf32> to vector<2x8x128xf32>
    %9 = arith.mulf %7, %8 : vector<2x8x128xf32>
    %c0_6 = arith.constant 0 : index
    %c0_7 = arith.constant 0 : index
    %c0_8 = arith.constant 0 : index
    %10 = vector.load %arg4[%c0_6, %c0_7, %c0_8] : memref<2x8x128xf32, #tpu.memory_space<vmem>>, vector<2x8x128xf32>
    tpu.vector_store %arg4[%c0_6, %c0_7, %c0_8], %9 {strides = array<i32>} : memref<2x8x128xf32, #tpu.memory_space<vmem>>, vector<2x8x128xf32>,
    return
  }
  func.func @transform_0(%arg0: i32, %arg1: i32) -> (i32, i32, i32) {
    %c0_i32 = arith.constant 0 : i32
    %c0_i32_0 = arith.constant 0 : i32
    %c0_i32_1 = arith.constant 0 : i32
    return %arg0, %c0_i32, %c0_i32_0 : i32, i32, i32
  }
  func.func @transform_1(%arg0: i32, %arg1: i32) -> (i32, i32, i32) {
    %c0_i32 = arith.constant 0 : i32
    %c0_i32_0 = arith.constant 0 : i32
    return %arg0, %arg1, %c0_i32 : i32, i32, i32
  }
  func.func @transform_2(%arg0: i32, %arg1: i32) -> (i32, i32, i32) {
    %c0_i32 = arith.constant 0 : i32
    %c0_i32_0 = arith.constant 0 : i32
    return %arg0, %arg1, %c0_i32 : i32, i32, i32
  }
}

</mosaic_0001>

<llo_original>
// kernel: tpu_custom_call.1
$region0: #{tpu_custom_call.1}
  #allocation0 [shape = 'u32[]', space=smem, size = 0x4, offset = 0x4, fixed_abs, tag = 'smem constant byte address 0x4 - core index']
  #allocation1 [shape = 'u32[72,128]{1,0:T(1,128)}', space=vmem, size = 0x9000, scoped, tag = 'internal scratch']
  %s0 = inlined_call_operand.vmem [shape: u16[2,1,128], index: 0, kind: input, shape index: {}]
  %s1 = inlined_call_operand.hbm [shape: f32[2,8,128], index: 1, kind: input, shape index: {}]
  %s2 = inlined_call_operand.hbm [shape: f32[2,8,128], index: 2, kind: output, shape index: {}]
  %s3 = sld [smem:[#allocation0]]
  $region22: #{tpu_custom_call.1} parent=0
    _
  %s5 = ssub.s32 1, %s3
  %s6 = scalar_select 0, %s5, %s3
  $region1: #{tpu_custom_call.1} parent=0
    #allocation2 [shape = 'u8[8192]{0}', space=vmem, size = 0x2000, scoped, tag = 'input window, operand 1, single buffered']
    #allocation3 [shape = 's32[1]{0}', space=sflag, size = 0x4, scoped, tag = 'scoped memory for tpu_custom_call.1']
    #allocation4 [shape = 's32[1]{0}', space=sflag, size = 0x4, scoped, tag = 'scoped memory for tpu_custom_call.1']
    #allocation5 [shape = 'u8[8192]{0}', space=vmem, size = 0x2000, scoped, tag = 'output window, operand 0, single buffered']
    %7 = vsyncpa [#allocation3], 0
    %8 = vsyncpa [#allocation4], 0
    // Predicated region
    $region2: #{tpu_custom_call.1} parent=1 // pred_check
      _
    $region3: #{tpu_custom_call.1} parent=1 // pred_check_branch
      %10 = sbr.rel (0) target = $region5
    $region4: #{tpu_custom_call.1} parent=1 // pred_region
      _
    $region5: #{tpu_custom_call.1} parent=1 // pred_fallthru
      _
    // Predicated region
    $region6: #{tpu_custom_call.1} parent=1 // pred_check
      _
    $region7: #{tpu_custom_call.1} parent=1 // pred_check_branch
      %12 = sbr.rel (0) target = $region9
    $region8: #{tpu_custom_call.1} parent=1 // pred_region
      %14 = vsyncadd [#allocation3], 0
      %s15 = sshll.u32 %s1, 4
      %s16 = int_to_ptr.hbm [resolvable:$true] %s15
      %s17 = sshll.u32 [#allocation2], 4
      %s18 = int_to_ptr.vmem [resolvable:$true] %s17
      %23 = dma.hbm_to_vmem [thread:$0]  %s16, 256, %s18, [#allocation3], 128, 128, 8
    $region9: #{tpu_custom_call.1} parent=1 // pred_fallthru
      _
    // Predicated region
    $region10: #{tpu_custom_call.1} parent=1 // pred_check
      _
    $region11: #{tpu_custom_call.1} parent=1 // pred_check_branch
      %25 = sbr.rel (0) target = $region13
    $region12: #{tpu_custom_call.1} parent=1 // pred_region
      %27 = dma.done [#allocation3], 256
    $region13: #{tpu_custom_call.1} parent=1 // pred_fallthru
      _
    %v28 = vld [vmem:[%s0] sm:$0x1]
    %v29 = vld [vmem:[%s0 + $0x1] sm:$0x1]
    %v30 = vunpack.c.l.b16 %v28
    %v31 = vunpack.c.l.b16 %v29
    %v32 = vand.u32 %v30, 65535
    %v33 = vand.u32 %v31, 65535
    %vm34 = vcmp.lt.s32.totalorder %v32, 45875
    %vm35 = vcmp.lt.s32.totalorder %v33, 45875
    %v36 = vsel %vm34, 1.4285715, 0.0
    %v37 = vsel %vm35, 1.4285715, 0.0
    %v38 = vld [vmem:[#allocation2] sm:$0xff]
    %v39 = vld [vmem:[#allocation2 + $0x8] sm:$0xff]
    %v40 = vperm.slane %v36, 0
    %v41 = vperm.slane %v37, 0
    %v42 = vmul.f32 %v38, %v40
    %v43 = vmul.f32 %v39, %v41
    %44 = vst [vmem:[#allocation5] sm:$0xff] %v42
    %45 = vst [vmem:[#allocation5 + $0x8] sm:$0xff] %v43
    // Predicated region
    $region14: #{tpu_custom_call.1} parent=1 // pred_check
      _
    $region15: #{tpu_custom_call.1} parent=1 // pred_check_branch
      %47 = sbr.rel (0) target = $region17
    $region16: #{tpu_custom_call.1} parent=1 // pred_region
      %49 = vsyncadd [#allocation4], 0
      %s50 = sshll.u32 [#allocation5], 4
      %s51 = int_to_ptr.vmem [resolvable:$true] %s50
      %s52 = sshll.u32 %s2, 4
      %s53 = int_to_ptr.hbm [resolvable:$true] %s52
      %58 = dma.vmem_to_hbm [thread:$0]  %s51, 256, %s53, [#allocation4], 128, 128, 8
    $region17: #{tpu_custom_call.1} parent=1 // pred_fallthru
      _
    // Predicated region
    $region18: #{tpu_custom_call.1} parent=1 // pred_check
      _
    $region19: #{tpu_custom_call.1} parent=1 // pred_check_branch
      %60 = sbr.rel (0) target = $region21
    $region20: #{tpu_custom_call.1} parent=1 // pred_region
      %62 = dma.done [#allocation4], 256
    $region21: #{tpu_custom_call.1} parent=1 // pred_fallthru
      _
    %63 = vsyncpa [#allocation3], 1
    %64 = vsyncpa [#allocation4], 1

</llo_original>
